<compile_context>
chip_gen: v7x
topology: tpu7x:2x2x1
jax: 0.10.0
libtpu: 0.0.40
codegen_flags: <defaults>
</compile_context>

<pallas_src>
import math
import jax
import jax.numpy as jnp
from jax.experimental import pallas as pl
from jax.experimental.pallas import tpu as pltpu


def _fused_mlp_cat_kernel(slab_ref, o_ref):
    # slab layout (8, 8) f32:
    #   rows 0..1 : x padded to 8 cols (only cols 0..1 meaningful)
    #   rows 2..3 : folded weight W (2, 8)
    #   row  4    : folded bias   b (1, 8)
    #   rows 5..7 : zero padding (keeps the slab a full (8,*) sublane tile)
    slab = slab_ref[...]                       # single load

    w0 = slab[2:3, :]                          # (1, 8)
    w1 = slab[3:4, :]                          # (1, 8)
    b = slab[4:5, :]                           # (1, 8)

    # cat((y1, y1)) then cat((t1, t1))  ==  4 stacked copies of the fused
    # result; realize the replication on the *input* rows so the compute
    # lands directly in the full (8, 8) output tile.
    x_rep = jnp.tile(slab[0:2, :], (4, 1))     # (8, 8)
    x0 = x_rep[:, 0:1]                         # (8, 1)
    x1 = x_rep[:, 1:2]                         # (8, 1)

    # VPU broadcast-FMA (no MXU for a K=2 contraction):
    #   y = x[:,0]*W[0,:] + x[:,1]*W[1,:] + b
    y = x0 * w0 + x1 * w1 + b                  # (8, 8) f32

    # One unmasked full-tile store.
    o_ref[...] = y.astype(o_ref.dtype)


def model_forward(x, params):
    (w1, b1), (w2, b2), (w3, b3) = params

    # Fold the three Linears at trace time.
    w_fold = w1 @ w2 @ w3                              # (2, 8)
    b_fold = b1 @ w2 @ w3 + b2 @ w3 + b3               # (1, 8)

    B = x.shape[0]                                     # 2
    N = w_fold.shape[1]                                # 8
    out_rows = 4 * B                                   # two cats along dim 0

    # Pack x + params into one (8, N) slab -> exactly one input DMA.
    x_pad = jnp.zeros((B, N), jnp.float32).at[:, : x.shape[1]].set(x)
    slab = jnp.concatenate([x_pad, w_fold, b_fold], axis=0)   # (B+3, N) = (5, 8)
    slab = jnp.pad(slab, ((0, 8 - slab.shape[0]), (0, 0)))    # (8, 8)

    vmem = pl.BlockSpec(memory_space=pltpu.MemorySpace.VMEM)
    return pl.pallas_call(
        _fused_mlp_cat_kernel,
        out_shape=jax.ShapeDtypeStruct((out_rows, N), jnp.float32),
        in_specs=[vmem],
        out_specs=vmem,
    )(slab)


def init_linear(key, in_f, out_f):
    """PyTorch-style uniform(-1/sqrt(in), 1/sqrt(in)) init; weight stored as (in, out)."""
    kw, kb = jax.random.split(key)
    bound = 1.0 / math.sqrt(in_f)
    w = jax.random.uniform(kw, (in_f, out_f), jnp.float32, -bound, bound)
    b = jax.random.uniform(kb, (1, out_f), jnp.float32, -bound, bound)
    return w, b


def reference_forward(x, params):
    """Unfused reference mirroring the original PyTorch dataflow."""
    (w1, b1), (w2, b2), (w3, b3) = params
    y1 = x @ w1 + b1
    t1 = jnp.concatenate([y1, y1], axis=0)
    t2 = jnp.concatenate([t1, t1], axis=0)
    y2 = t2 @ w2 + b2
    return y2 @ w3 + b3


if __name__ == "__main__":
    key = jax.random.PRNGKey(0)
    kx, k1, k2, k3 = jax.random.split(key, 4)

    x = jax.random.normal(kx, (2, 2), jnp.float32)   # matches torch.randn(2, 2)

    params = (
        init_linear(k1, 2, 3),   # layers1
        init_linear(k2, 3, 6),   # layers2 (width-fixed, see note above)
        init_linear(k3, 6, 8),   # layers3
    )

    out = model_forward(x, params)
    out = jax.block_until_ready(out)

    ref = reference_forward(x, params)
    assert out.shape == (8, 8)
    assert jnp.allclose(out, ref, atol=1e-5, rtol=1e-5)

    print("KERNEL_OK")
</pallas_src>

<mosaic_0001>
module attributes {stable_mosaic.version = 11 : i64} {
  func.func @_fused_mlp_cat_kernel(%arg0: memref<8x8xf32, #tpu.memory_space<vmem>>, %arg1: memref<8x8xf32, #tpu.memory_space<vmem>>) attributes {dimension_semantics = [], scalar_prefetch = 0 : i64, scratch_operands = 0 : i64, tpu.core_type = #tpu.core_type<tc>} {
    %c0 = arith.constant 0 : index
    %c0_0 = arith.constant 0 : index
    %0 = vector.load %arg0[%c0, %c0_0] : memref<8x8xf32, #tpu.memory_space<vmem>>, vector<8x8xf32>
    %1 = vector.extract_strided_slice %0 {offsets = [2, 0], sizes = [1, 8], strides = [1, 1]} : vector<8x8xf32> to vector<1x8xf32>
    %2 = vector.extract_strided_slice %0 {offsets = [3, 0], sizes = [1, 8], strides = [1, 1]} : vector<8x8xf32> to vector<1x8xf32>
    %3 = vector.extract_strided_slice %0 {offsets = [4, 0], sizes = [1, 8], strides = [1, 1]} : vector<8x8xf32> to vector<1x8xf32>
    %4 = vector.extract_strided_slice %0 {offsets = [0, 0], sizes = [2, 8], strides = [1, 1]} : vector<8x8xf32> to vector<2x8xf32>
    %5 = tpu.concatenate %4, %4, %4, %4 in 0 : vector<2x8xf32>, vector<2x8xf32>, vector<2x8xf32>, vector<2x8xf32> -> vector<8x8xf32>
    %6 = vector.extract_strided_slice %5 {offsets = [0, 0], sizes = [8, 1], strides = [1, 1]} : vector<8x8xf32> to vector<8x1xf32>
    %7 = vector.extract_strided_slice %5 {offsets = [0, 1], sizes = [8, 1], strides = [1, 1]} : vector<8x8xf32> to vector<8x1xf32>
    %8 = vector.broadcast %6 : vector<8x1xf32> to vector<8x8xf32>
    %9 = vector.broadcast %1 : vector<1x8xf32> to vector<8x8xf32>
    %10 = arith.mulf %8, %9 : vector<8x8xf32>
    %11 = vector.broadcast %7 : vector<8x1xf32> to vector<8x8xf32>
    %12 = vector.broadcast %2 : vector<1x8xf32> to vector<8x8xf32>
    %13 = arith.mulf %11, %12 : vector<8x8xf32>
    %14 = arith.addf %10, %13 : vector<8x8xf32>
    %15 = vector.broadcast %3 : vector<1x8xf32> to vector<8x8xf32>
    %16 = arith.addf %14, %15 : vector<8x8xf32>
    %c0_1 = arith.constant 0 : index
    %c0_2 = arith.constant 0 : index
    %17 = vector.load %arg1[%c0_1, %c0_2] : memref<8x8xf32, #tpu.memory_space<vmem>>, vector<8x8xf32>
    tpu.vector_store %arg1[%c0_1, %c0_2], %16 {strides = array<i32>} : memref<8x8xf32, #tpu.memory_space<vmem>>, vector<8x8xf32>,
    return
  }
}

</mosaic_0001>

<llo_original>
// kernel: tpu_custom_call.1
$region0: #{tpu_custom_call.1}
  #allocation0 [shape = 'u32[]', space=smem, size = 0x4, offset = 0x4, fixed_abs, tag = 'smem constant byte address 0x4 - core index']
  #allocation1 [shape = 'u32[144,128]{1,0:T(1,128)}', space=vmem, size = 0x12000, scoped, tag = 'internal scratch']
  %s0 = inlined_call_operand.hbm [shape: f32[8,8], index: 0, kind: input, shape index: {}]
  %s1 = inlined_call_operand.hbm [shape: f32[8,8], index: 1, kind: output, shape index: {}]
  %s2 = sld [smem:[#allocation0]]
  $region18: #{tpu_custom_call.1} parent=0
    _
  %s4 = ssub.s32 1, %s2
  %s5 = scalar_select 0, %s4, %s2
  $region1: #{tpu_custom_call.1} parent=0
    #allocation2 [shape = 'u8[4096]{0}', space=vmem, size = 0x1000, scoped, tag = 'input window, operand 0, single buffered']
    #allocation3 [shape = 's32[1]{0}', space=sflag, size = 0x4, scoped, tag = 'scoped memory for tpu_custom_call.1']
    #allocation4 [shape = 's32[1]{0}', space=sflag, size = 0x4, scoped, tag = 'scoped memory for tpu_custom_call.1']
    #allocation5 [shape = 'u8[4096]{0}', space=vmem, size = 0x1000, scoped, tag = 'output window, operand 0, single buffered']
    %6 = vsyncpa [#allocation3], 0
    %7 = vsyncpa [#allocation4], 0
    // Predicated region
    $region2: #{tpu_custom_call.1} parent=1 // pred_check
      _
    $region3: #{tpu_custom_call.1} parent=1 // pred_check_branch
      %9 = sbr.rel (0) target = $region5
    $region4: #{tpu_custom_call.1} parent=1 // pred_region
      %s11 = ssub.s32 128, 128
      %12 = vsyncadd [#allocation3], %s11
      %s14 = sshll.u32 [#allocation2], 4
      %s15 = int_to_ptr.vmem [resolvable:$true] %s14
      %17 = dma.hbm_to_vmem [thread:$0]  %s0, 128, %s15, [#allocation3]
    $region5: #{tpu_custom_call.1} parent=1 // pred_fallthru
      _
    // Predicated region
    $region6: #{tpu_custom_call.1} parent=1 // pred_check
      _
    $region7: #{tpu_custom_call.1} parent=1 // pred_check_branch
      %19 = sbr.rel (0) target = $region9
    $region8: #{tpu_custom_call.1} parent=1 // pred_region
      %20 = dma.done [#allocation3], 128
    $region9: #{tpu_custom_call.1} parent=1 // pred_fallthru
      _
    %v21 = vld [vmem:[#allocation2] sm:$0xff]
    %v23 = vrot.slane %v21, 6
    %v25 = vrot.slane %v21, 4
    %v27 = vrot.slane %v21, 2
    %vm29 = vcmask 1041408
    %v30 = vsel %vm29, %v21, %v23
    %vm31 = vcmask 1043456
    %v32 = vsel %vm31, %v30, %v25
    %vm33 = vcmask 1045504
    %v34 = vsel %vm33, %v32, %v27
    %36 = vset.pattern.permute.xlu0 0
    %37 = vperm.xlu0 %36, %v34
    %v38 = vpop.permute.xlu0 %37
    %v40 = vlaneseq
    %v41 = vshrl.u32 %v40, 7
    %v42 = vsub.s32 2, %v41
    %v43 = vrot.slane %v21, %v42
    %v44 = vmul.f32 %v38, %v43
    %45 = vset.pattern.permute.xlu0 1
    %46 = vperm.xlu0 %45, %v34
    %v47 = vpop.permute.xlu0 %46
    %v49 = vlaneseq
    %v50 = vshrl.u32 %v49, 7
    %v51 = vsub.s32 3, %v50
    %v52 = vrot.slane %v21, %v51
    %v53 = vmul.f32 %v47, %v52
    %v54 = vadd.f32 %v44, %v53
    %v55 = vlaneseq
    %v56 = vshrl.u32 %v55, 7
    %v57 = vsub.s32 4, %v56
    %v58 = vrot.slane %v21, %v57
    %v59 = vadd.f32 %v54, %v58
    %vm60 = vcmask 64512
    %61 = vst.msk [vmem:[#allocation5] sm:$0xff] %vm60, %v59
    // Predicated region
    $region10: #{tpu_custom_call.1} parent=1 // pred_check
      _
    $region11: #{tpu_custom_call.1} parent=1 // pred_check_branch
      %63 = sbr.rel (0) target = $region13
    $region12: #{tpu_custom_call.1} parent=1 // pred_region
      %s65 = ssub.s32 128, 128
      %66 = vsyncadd [#allocation4], %s65
      %s68 = sshll.u32 [#allocation5], 4
      %s69 = int_to_ptr.vmem [resolvable:$true] %s68
      %71 = dma.vmem_to_hbm [thread:$0]  %s69, 128, %s1, [#allocation4]
    $region13: #{tpu_custom_call.1} parent=1 // pred_fallthru
      _
    // Predicated region
    $region14: #{tpu_custom_call.1} parent=1 // pred_check
      _
    $region15: #{tpu_custom_call.1} parent=1 // pred_check_branch
      %73 = sbr.rel (0) target = $region17
    $region16: #{tpu_custom_call.1} parent=1 // pred_region
      %74 = dma.done [#allocation4], 128
    $region17: #{tpu_custom_call.1} parent=1 // pred_fallthru
      _
    %75 = vsyncpa [#allocation3], 1
    %76 = vsyncpa [#allocation4], 1

</llo_original>
